<compile_context>
chip_gen: v5e
topology: v5e:2x2
jax: 0.10.0
libtpu: 0.0.40
codegen_flags: <defaults>
</compile_context>

<pallas_src>
import functools

import jax
import jax.numpy as jnp
from jax.experimental import pallas as pl
from jax.experimental.pallas import tpu as pltpu


def _adain_kernel(x_ref, w_ref, b_ref, o_ref, *, eps, inv_n):
    # x_ref: (TILE_BC, HW_pad)   w_ref/b_ref: (TILE_BC, 1) f32   o_ref: like x_ref
    x = x_ref[...].astype(jnp.float32)

    # One-pass statistics. Padded lanes are zero, so they contribute nothing to
    # either sum; dividing by the true H*W (inv_n) keeps the stats unbiased.
    s1 = jnp.sum(x, axis=1, keepdims=True)
    s2 = jnp.sum(x * x, axis=1, keepdims=True)
    mean = s1 * inv_n
    var = jnp.maximum(s2 * inv_n - mean * mean, 0.0)  # biased var; clamp cancellation
    inv_std = jax.lax.rsqrt(var + eps)

    # Fold the affine:  out = x * scale + shift   (one mul + one add per element).
    scale = inv_std * w_ref[...]
    shift = b_ref[...] - mean * scale
    o_ref[...] = (x * scale + shift).astype(o_ref.dtype)


def _vmem_capacity_bytes():
    try:
        return int(pltpu.get_tpu_info().vmem_capacity_bytes)
    except Exception:
        return 64 * 1024 * 1024  # conservative (v7x-sized) fallback


def _pick_tile_bc(bc, hw_pad, itemsize, budget_bytes):
    # Per-row VMEM footprint: double-buffered input + output blocks in the
    # native dtype plus ~2 full-size f32 temporaries inside the kernel body.
    per_row = hw_pad * (4 * itemsize + 8)
    max_rows = max(8, budget_bytes // per_row)
    tile = min(bc, int(max_rows))
    if tile < bc:
        tile = max(8, (tile // 8) * 8)  # sublane multiple of 8 when actually tiling
    return tile


def adaptive_instance_norm_2d(x, weight, bias, eps=1e-5):
    """AdaIN forward. x: (B, C, H, W); weight, bias: (B*C,). Output matches x.dtype."""
    b, c, h, w = x.shape
    bc, hw = b * c, h * w

    # Lane-dense 2-D view: pad the flattened spatial axis to a multiple of 128.
    hw_pad = ((hw + 127) // 128) * 128
    x2d = x.reshape(bc, hw)
    if hw_pad != hw:
        x2d = jnp.pad(x2d, ((0, 0), (0, hw_pad - hw)))

    w2d = weight.reshape(bc, 1).astype(jnp.float32)
    b2d = bias.reshape(bc, 1).astype(jnp.float32)

    itemsize = jnp.dtype(x.dtype).itemsize
    # Scoped-VMEM limit: half of physical VMEM (64 MiB on v5e/v6e, 32 MiB on v7x).
    vmem_limit = min(_vmem_capacity_bytes() // 2, 100 * 1024 * 1024)
    tile_bc = _pick_tile_bc(bc, hw_pad, itemsize, int(0.75 * vmem_limit))
    grid = (pl.cdiv(bc, tile_bc),)

    kernel = functools.partial(_adain_kernel, eps=float(eps), inv_n=1.0 / float(hw))

    cost = pl.CostEstimate(
        flops=5 * bc * hw_pad,
        transcendentals=bc,
        bytes_accessed=2 * bc * hw_pad * itemsize + 2 * bc * 4,
    )

    out2d = pl.pallas_call(
        kernel,
        out_shape=jax.ShapeDtypeStruct((bc, hw_pad), x.dtype),
        grid_spec=pltpu.PrefetchScalarGridSpec(
            num_scalar_prefetch=0,
            grid=grid,
            in_specs=[
                pl.BlockSpec((tile_bc, hw_pad), lambda i: (i, 0)),
                pl.BlockSpec((tile_bc, 1), lambda i: (i, 0)),
                pl.BlockSpec((tile_bc, 1), lambda i: (i, 0)),
            ],
            out_specs=pl.BlockSpec((tile_bc, hw_pad), lambda i: (i, 0)),
        ),
        compiler_params=pltpu.CompilerParams(
            dimension_semantics=("parallel",),  # rows independent -> megacore shard
            vmem_limit_bytes=int(vmem_limit),
        ),
        cost_estimate=cost,
    )(x2d, w2d, b2d)

    if hw_pad != hw:
        out2d = out2d[:, :hw]
    return out2d.reshape(b, c, h, w)


if __name__ == "__main__":
    B, C, H, W = 2, 4, 16, 16
    key = jax.random.PRNGKey(0)
    kx, kw, kb = jax.random.split(key, 3)

    x = jax.random.normal(kx, (B, C, H, W), dtype=jnp.float32)
    # AdaIN weight/bias are assigned externally per (batch, channel).
    weight = jax.random.normal(kw, (B * C,), dtype=jnp.float32) * 0.5 + 1.0
    bias = jax.random.normal(kb, (B * C,), dtype=jnp.float32) * 0.1

    out = adaptive_instance_norm_2d(x, weight, bias, eps=1e-5)
    out = jax.block_until_ready(out)

    # Pure-JAX two-pass reference (instance norm over spatial dims + affine).
    xf = x.reshape(B * C, H * W)
    mean = xf.mean(axis=1, keepdims=True)
    var = ((xf - mean) ** 2).mean(axis=1, keepdims=True)
    ref = ((xf - mean) / jnp.sqrt(var + 1e-5) * weight[:, None]
           + bias[:, None]).reshape(B, C, H, W)
    assert jnp.allclose(out, ref, atol=1e-4, rtol=1e-4), (
        float(jnp.max(jnp.abs(out - ref))))

    print("KERNEL_OK")
</pallas_src>

<mosaic_0001>
module attributes {stable_mosaic.version = 11 : i64} {
  func.func @_adain_kernel(%arg0: i32, %arg1: memref<8x256xf32, #tpu.memory_space<vmem>>, %arg2: memref<8x1xf32, #tpu.memory_space<vmem>>, %arg3: memref<8x1xf32, #tpu.memory_space<vmem>>, %arg4: memref<8x256xf32, #tpu.memory_space<vmem>>) attributes {dimension_semantics = [#tpu.dimension_semantics<parallel>], iteration_bounds = array<i64: 1>, scalar_prefetch = 0 : i64, scratch_operands = 0 : i64, tpu.core_type = #tpu.core_type<tc>, window_params = [{transform_indices = @transform_0, window_bounds = array<i64: 8, 256>}, {transform_indices = @transform_1, window_bounds = array<i64: 8, 1>}, {transform_indices = @transform_2, window_bounds = array<i64: 8, 1>}, {transform_indices = @transform_3, window_bounds = array<i64: 8, 256>}]} {
    %c0 = arith.constant 0 : index
    %c0_0 = arith.constant 0 : index
    %0 = vector.load %arg1[%c0, %c0_0] : memref<8x256xf32, #tpu.memory_space<vmem>>, vector<8x256xf32>
    %cst = arith.constant dense<0.000000e+00> : vector<8xf32>
    %1 = vector.multi_reduction <add>, %0, %cst [1] : vector<8x256xf32> to vector<8xf32>
    %2 = vector.shape_cast %1 : vector<8xf32> to vector<8x1xf32>
    %3 = arith.mulf %0, %0 : vector<8x256xf32>
    %cst_1 = arith.constant dense<0.000000e+00> : vector<8xf32>
    %4 = vector.multi_reduction <add>, %3, %cst_1 [1] : vector<8x256xf32> to vector<8xf32>
    %5 = vector.shape_cast %4 : vector<8xf32> to vector<8x1xf32>
    %cst_2 = arith.constant 3.906250e-03 : f32
    %6 = vector.broadcast %cst_2 : f32 to vector<8x1xf32>
    %7 = arith.mulf %2, %6 : vector<8x1xf32>
    %cst_3 = arith.constant 3.906250e-03 : f32
    %8 = vector.broadcast %cst_3 : f32 to vector<8x1xf32>
    %9 = arith.mulf %5, %8 : vector<8x1xf32>
    %10 = arith.mulf %7, %7 : vector<8x1xf32>
    %11 = arith.subf %9, %10 : vector<8x1xf32>
    %cst_4 = arith.constant 0.000000e+00 : f32
    %12 = vector.broadcast %cst_4 : f32 to vector<8x1xf32>
    %13 = arith.maximumf %11, %12 : vector<8x1xf32>
    %cst_5 = arith.constant 9.99999974E-6 : f32
    %14 = vector.broadcast %cst_5 : f32 to vector<8x1xf32>
    %15 = arith.addf %13, %14 : vector<8x1xf32>
    %16 = math.rsqrt %15 : vector<8x1xf32>
    %c0_6 = arith.constant 0 : index
    %c0_7 = arith.constant 0 : index
    %17 = vector.load %arg2[%c0_6, %c0_7] : memref<8x1xf32, #tpu.memory_space<vmem>>, vector<8x1xf32>
    %18 = arith.mulf %16, %17 : vector<8x1xf32>
    %c0_8 = arith.constant 0 : index
    %c0_9 = arith.constant 0 : index
    %19 = vector.load %arg3[%c0_8, %c0_9] : memref<8x1xf32, #tpu.memory_space<vmem>>, vector<8x1xf32>
    %20 = arith.mulf %7, %18 : vector<8x1xf32>
    %21 = arith.subf %19, %20 : vector<8x1xf32>
    %22 = vector.broadcast %18 : vector<8x1xf32> to vector<8x256xf32>
    %23 = arith.mulf %0, %22 : vector<8x256xf32>
    %24 = vector.broadcast %21 : vector<8x1xf32> to vector<8x256xf32>
    %25 = arith.addf %23, %24 : vector<8x256xf32>
    %c0_10 = arith.constant 0 : index
    %c0_11 = arith.constant 0 : index
    %26 = vector.load %arg4[%c0_10, %c0_11] : memref<8x256xf32, #tpu.memory_space<vmem>>, vector<8x256xf32>
    tpu.vector_store %arg4[%c0_10, %c0_11], %25 {strides = array<i32>} : memref<8x256xf32, #tpu.memory_space<vmem>>, vector<8x256xf32>,
    return
  }
  func.func @transform_0(%arg0: i32) -> (i32, i32) {
    %c0_i32 = arith.constant 0 : i32
    %c0_i32_0 = arith.constant 0 : i32
    return %arg0, %c0_i32 : i32, i32
  }
  func.func @transform_1(%arg0: i32) -> (i32, i32) {
    %c0_i32 = arith.constant 0 : i32
    %c0_i32_0 = arith.constant 0 : i32
    return %arg0, %c0_i32 : i32, i32
  }
  func.func @transform_2(%arg0: i32) -> (i32, i32) {
    %c0_i32 = arith.constant 0 : i32
    %c0_i32_0 = arith.constant 0 : i32
    return %arg0, %c0_i32 : i32, i32
  }
  func.func @transform_3(%arg0: i32) -> (i32, i32) {
    %c0_i32 = arith.constant 0 : i32
    %c0_i32_0 = arith.constant 0 : i32
    return %arg0, %c0_i32 : i32, i32
  }
}

</mosaic_0001>

<llo_original>
// kernel: tpu_custom_call.1
$region0: #{tpu_custom_call.1}
  #allocation0 [shape = 'u32[]', space=smem, size = 0x4, offset = 0x4, fixed_abs, tag = 'smem constant byte address 0x4 - core index']
  #allocation1 [shape = 'u32[72,128]{1,0:T(1,128)}', space=vmem, size = 0x9000, scoped, tag = 'internal scratch']
  %s0 = inlined_call_operand.vmem [shape: f32[8,256], index: 0, kind: input, shape index: {}]
  %s1 = inlined_call_operand.vmem [shape: f32[8,1], index: 1, kind: input, shape index: {}]
  %s2 = inlined_call_operand.vmem [shape: f32[8,1], index: 2, kind: input, shape index: {}]
  %s3 = inlined_call_operand.hbm [shape: f32[8,256], index: 3, kind: output, shape index: {}]
  %s4 = sld [smem:[#allocation0]]
  $region22: #{tpu_custom_call.1} parent=0
    _
  %s6 = ssub.s32 1, %s4
  %s7 = scalar_select 0, %s6, %s4
  $region1: #{tpu_custom_call.1} parent=0
    #allocation2 [shape = 'u8[8192]{0}', space=vmem, size = 0x2000, scoped, tag = 'output window, operand 0, single buffered']
    #allocation3 [shape = 's32[1]{0}', space=sflag, size = 0x4, scoped, tag = 'scoped memory for tpu_custom_call.1']
    %8 = vsyncpa [#allocation3], 0
    // Predicated region
    $region2: #{tpu_custom_call.1} parent=1 // pred_check
      _
    $region3: #{tpu_custom_call.1} parent=1 // pred_check_branch
      %10 = sbr.rel (0) target = $region5
    $region4: #{tpu_custom_call.1} parent=1 // pred_region
      _
    $region5: #{tpu_custom_call.1} parent=1 // pred_fallthru
      _
    // Predicated region
    $region6: #{tpu_custom_call.1} parent=1 // pred_check
      _
    $region7: #{tpu_custom_call.1} parent=1 // pred_check_branch
      %12 = sbr.rel (0) target = $region9
    $region8: #{tpu_custom_call.1} parent=1 // pred_region
      _
    $region9: #{tpu_custom_call.1} parent=1 // pred_fallthru
      _
    // Predicated region
    $region10: #{tpu_custom_call.1} parent=1 // pred_check
      _
    $region11: #{tpu_custom_call.1} parent=1 // pred_check_branch
      %14 = sbr.rel (0) target = $region13
    $region12: #{tpu_custom_call.1} parent=1 // pred_region
      _
    $region13: #{tpu_custom_call.1} parent=1 // pred_fallthru
      _
    %v15 = vld [vmem:[%s0] sm:$0xff]
    %v16 = vld [vmem:[%s0 + $0x8] sm:$0xff]
    %v17 = vadd.f32 %v15, %v16
    %18 = vadd.xlane.f32.xlu0 %v17
    %v19 = vpop.xlane.xlu0 %18
    %v20 = vmul.f32 %v15, %v15
    %v21 = vmul.f32 %v16, %v16
    %v22 = vadd.f32 %v20, %v21
    %23 = vadd.xlane.f32.xlu0 %v22
    %v24 = vpop.xlane.xlu0 %23
    %v25 = vmul.f32 %v19, 0.00390625
    %v26 = vmul.f32 %v24, 0.00390625
    %v27 = vmul.f32 %v25, %v25
    %v28 = vsub.f32 %v26, %v27
    %v29 = vmax.f32 %v28, 0.0
    %v30 = vadd.f32 %v29, 1e-05
    %v31 = vrsqrt.pop %v30
    %v32 = vmul.f32 %v31, %v30
    %v33 = vmul.f32 %v32, %v31
    %v34 = vmul.f32 0.5, %v33
    %v35 = vsub.f32 1.5, %v34
    %v36 = vmul.f32 %v31, %v35
    %vm37 = vweird.f32 %v30
    %vm38 = vweird.f32 %v31
    %vm39 = vmor %vm37, %vm38
    %v40 = vsel %vm39, %v31, %v36
    %v41 = vld [vmem:[%s1] sm:$0xff]
    %v42 = vmul.f32 %v40, %v41
    %v43 = vld [vmem:[%s2] sm:$0xff]
    %v44 = vmul.f32 %v25, %v42
    %v45 = vsub.f32 %v43, %v44
    %47 = vset.pattern.permute.xlu0 0
    %48 = vperm.xlu0 %47, %v42
    %v49 = vpop.permute.xlu0 %48
    %v51 = vmul.f32 %v15, %v49
    %v52 = vmul.f32 %v16, %v49
    %54 = vset.pattern.permute.xlu0 0
    %55 = vperm.xlu0 %54, %v45
    %v56 = vpop.permute.xlu0 %55
    %v58 = vadd.f32 %v51, %v56
    %v59 = vadd.f32 %v52, %v56
    %60 = vst [vmem:[#allocation2] sm:$0xff] %v58
    %61 = vst [vmem:[#allocation2 + $0x8] sm:$0xff] %v59
    // Predicated region
    $region14: #{tpu_custom_call.1} parent=1 // pred_check
      _
    $region15: #{tpu_custom_call.1} parent=1 // pred_check_branch
      %63 = sbr.rel (0) target = $region17
    $region16: #{tpu_custom_call.1} parent=1 // pred_region
      %65 = vsyncadd [#allocation3], 0
      %s67 = sshll.u32 [#allocation2], 4
      %s68 = int_to_ptr.vmem [resolvable:$true] %s67
      %s69 = sshll.u32 %s3, 4
      %s70 = int_to_ptr.hbm [resolvable:$true] %s69
      %72 = dma.vmem_to_hbm [thread:$0]  %s68, 256, %s70, [#allocation3]
    $region17: #{tpu_custom_call.1} parent=1 // pred_fallthru
      _
    // Predicated region
    $region18: #{tpu_custom_call.1} parent=1 // pred_check
      _
    $region19: #{tpu_custom_call.1} parent=1 // pred_check_branch
      %74 = sbr.rel (0) target = $region21
    $region20: #{tpu_custom_call.1} parent=1 // pred_region
      %76 = dma.done [#allocation3], 256
    $region21: #{tpu_custom_call.1} parent=1 // pred_fallthru
      _
    %77 = vsyncpa [#allocation3], 1

</llo_original>
